<compile_context>
chip_gen: v7x
topology: tpu7x:2x2x1
jax: 0.10.0
libtpu: 0.0.40
codegen_flags: <defaults>
</compile_context>

<pallas_src>
import functools

import jax
import jax.numpy as jnp
from jax.experimental import pallas as pl
from jax.experimental.pallas import tpu as pltpu


def _rmsnorm_kernel(x_ref, w_ref, o_ref, *, eps: float, d_model: int):
    # x_ref: (tm, d_model)  VMEM tile of the flattened input
    # w_ref: (1, d_model)   resident per-feature scale (float32)
    # o_ref: (tm, d_model)  output tile (input dtype)
    x = x_ref[...].astype(jnp.float32)
    mean_sq = jnp.sum(x * x, axis=-1, keepdims=True) * (1.0 / d_model) + eps
    inv_rms = jax.lax.rsqrt(mean_sq)  # EUP rsqrt — off the VALU critical path
    o_ref[...] = (x * w_ref[...].astype(jnp.float32) * inv_rms).astype(o_ref.dtype)


def _round_up(x: int, m: int) -> int:
    return (x + m - 1) // m * m


def rmsnorm_forward(x: jax.Array, weight: jax.Array, *, eps: float = 1e-5,
                    tm: int | None = None) -> jax.Array:
    """RMSNorm over the last dim of x, scaled by `weight` (shape (d_model,))."""
    d_model = weight.shape[-1]
    assert x.shape[-1] == d_model

    lead_shape = x.shape[:-1]
    m = 1
    for d in lead_shape:
        m *= d

    x2d = x.reshape(m, d_model)          # glue: flatten leading dims
    w2d = weight.reshape(1, d_model)     # glue: 2-D for a lane-dense VMEM block

    # Row tile: multiple of 8 (sublane), capped at 256; pad M instead of
    # collapsing tm to M for ragged sizes.
    if tm is None:
        tm = min(256, _round_up(m, 8))
    tm = max(8, _round_up(tm, 8))
    m_pad = _round_up(m, tm)
    if m_pad != m:
        x2d = jnp.pad(x2d, ((0, m_pad - m), (0, 0)))  # padded rows are discarded

    kernel = functools.partial(_rmsnorm_kernel, eps=eps, d_model=d_model)

    y2d = pl.pallas_call(
        kernel,
        out_shape=jax.ShapeDtypeStruct((m_pad, d_model), x.dtype),
        grid_spec=pltpu.PrefetchScalarGridSpec(
            num_scalar_prefetch=0,
            grid=(m_pad // tm,),
            in_specs=[
                pl.BlockSpec((tm, d_model), lambda i: (i, 0)),
                pl.BlockSpec((1, d_model), lambda i: (0, 0)),
            ],
            out_specs=pl.BlockSpec((tm, d_model), lambda i: (i, 0)),
        ),
        compiler_params=pltpu.CompilerParams(
            dimension_semantics=("parallel",),
            vmem_limit_bytes=64 * 1024 * 1024,
        ),
    )(x2d, w2d)

    if m_pad != m:
        y2d = y2d[:m]
    return y2d.reshape(*lead_shape, d_model)


if __name__ == "__main__":
    key = jax.random.PRNGKey(0)
    k_x, k_w = jax.random.split(key)

    batch, seq, d_model = 2, 8, 128
    eps = 1e-5

    x = jax.random.normal(k_x, (batch, seq, d_model), dtype=jnp.float32)
    # Module initializes weight to ones; perturb it deterministically so the
    # scale path is actually exercised by the check.
    weight = (jnp.ones((d_model,), dtype=jnp.float32)
              + 0.1 * jax.random.normal(k_w, (d_model,), dtype=jnp.float32))

    y = rmsnorm_forward(x, weight, eps=eps)
    y = jax.block_until_ready(y)

    # Reference (plain JAX, same math as the PyTorch forward).
    x32 = x.astype(jnp.float32)
    rms = jnp.sqrt(jnp.sum(x32 * x32, axis=-1, keepdims=True) / d_model + eps)
    y_ref = (x32 * weight / rms).astype(x.dtype)

    assert y.shape == (batch, seq, d_model)
    assert jnp.allclose(y, y_ref, atol=1e-5, rtol=1e-5)

    print("KERNEL_OK")
</pallas_src>

<mosaic_0001>
module attributes {stable_mosaic.version = 11 : i64} {
  func.func @_rmsnorm_kernel(%arg0: i32, %arg1: memref<16x128xf32, #tpu.memory_space<vmem>>, %arg2: memref<1x128xf32, #tpu.memory_space<vmem>>, %arg3: memref<16x128xf32, #tpu.memory_space<vmem>>) attributes {dimension_semantics = [#tpu.dimension_semantics<parallel>], iteration_bounds = array<i64: 1>, scalar_prefetch = 0 : i64, scratch_operands = 0 : i64, tpu.core_type = #tpu.core_type<tc>, window_params = [{transform_indices = @transform_0, window_bounds = array<i64: 16, 128>}, {pipeline_mode = #tpu.pipeline_mode<synchronous>, transform_indices = @transform_1, window_bounds = array<i64: 1, 128>}, {transform_indices = @transform_2, window_bounds = array<i64: 16, 128>}]} {
    %c0 = arith.constant 0 : index
    %c0_0 = arith.constant 0 : index
    %0 = vector.load %arg1[%c0, %c0_0] : memref<16x128xf32, #tpu.memory_space<vmem>>, vector<16x128xf32>
    %1 = arith.mulf %0, %0 : vector<16x128xf32>
    %cst = arith.constant dense<0.000000e+00> : vector<16xf32>
    %2 = vector.multi_reduction <add>, %1, %cst [1] : vector<16x128xf32> to vector<16xf32>
    %3 = vector.shape_cast %2 : vector<16xf32> to vector<16x1xf32>
    %cst_1 = arith.constant 7.812500e-03 : f32
    %4 = vector.broadcast %cst_1 : f32 to vector<16x1xf32>
    %5 = arith.mulf %3, %4 : vector<16x1xf32>
    %cst_2 = arith.constant 9.99999974E-6 : f32
    %6 = vector.broadcast %cst_2 : f32 to vector<16x1xf32>
    %7 = arith.addf %5, %6 : vector<16x1xf32>
    %8 = math.rsqrt %7 : vector<16x1xf32>
    %c0_3 = arith.constant 0 : index
    %c0_4 = arith.constant 0 : index
    %9 = vector.load %arg2[%c0_3, %c0_4] : memref<1x128xf32, #tpu.memory_space<vmem>>, vector<1x128xf32>
    %10 = vector.broadcast %9 : vector<1x128xf32> to vector<16x128xf32>
    %11 = arith.mulf %0, %10 : vector<16x128xf32>
    %12 = vector.broadcast %8 : vector<16x1xf32> to vector<16x128xf32>
    %13 = arith.mulf %11, %12 : vector<16x128xf32>
    %c0_5 = arith.constant 0 : index
    %c0_6 = arith.constant 0 : index
    %14 = vector.load %arg3[%c0_5, %c0_6] : memref<16x128xf32, #tpu.memory_space<vmem>>, vector<16x128xf32>
    tpu.vector_store %arg3[%c0_5, %c0_6], %13 {strides = array<i32>} : memref<16x128xf32, #tpu.memory_space<vmem>>, vector<16x128xf32>,
    return
  }
  func.func @transform_0(%arg0: i32) -> (i32, i32) {
    %c0_i32 = arith.constant 0 : i32
    %c0_i32_0 = arith.constant 0 : i32
    return %arg0, %c0_i32 : i32, i32
  }
  func.func @transform_1(%arg0: i32) -> (i32, i32) {
    %c0_i32 = arith.constant 0 : i32
    %c0_i32_0 = arith.constant 0 : i32
    %c0_i32_1 = arith.constant 0 : i32
    return %c0_i32, %c0_i32_0 : i32, i32
  }
  func.func @transform_2(%arg0: i32) -> (i32, i32) {
    %c0_i32 = arith.constant 0 : i32
    %c0_i32_0 = arith.constant 0 : i32
    return %arg0, %c0_i32 : i32, i32
  }
}

</mosaic_0001>

<llo_original>
// kernel: tpu_custom_call.1
$region0: #{tpu_custom_call.1}
  #allocation0 [shape = 'u32[]', space=smem, size = 0x4, offset = 0x4, fixed_abs, tag = 'smem constant byte address 0x4 - core index']
  #allocation1 [shape = 'u32[144,128]{1,0:T(1,128)}', space=vmem, size = 0x12000, scoped, tag = 'internal scratch']
  %s0 = inlined_call_operand.hbm [shape: f32[16,128], index: 0, kind: input, shape index: {}]
  %s1 = inlined_call_operand.hbm [shape: f32[1,128], index: 1, kind: input, shape index: {}]
  %s2 = inlined_call_operand.hbm [shape: f32[16,128], index: 2, kind: output, shape index: {}]
  %s3 = sld [smem:[#allocation0]]
  $region26: #{tpu_custom_call.1} parent=0
    _
  %s5 = ssub.s32 1, %s3
  %s6 = scalar_select 0, %s5, %s3
  $region1: #{tpu_custom_call.1} parent=0
    #allocation2 [shape = 'u8[8192]{0}', space=vmem, size = 0x2000, scoped, tag = 'input window, operand 0, single buffered']
    #allocation3 [shape = 's32[1]{0}', space=sflag, size = 0x4, scoped, tag = 'scoped memory for tpu_custom_call.1']
    #allocation4 [shape = 's32[1]{0}', space=sflag, size = 0x4, scoped, tag = 'scoped memory for tpu_custom_call.1']
    #allocation5 [shape = 'u8[512]{0}', space=vmem, size = 0x400, scoped, tag = 'input window, operand 1, single buffered']
    #allocation6 [shape = 's32[1]{0}', space=sflag, size = 0x4, scoped, tag = 'scoped memory for tpu_custom_call.1']
    #allocation7 [shape = 'u8[8192]{0}', space=vmem, size = 0x2000, scoped, tag = 'output window, operand 0, single buffered']
    %7 = vsyncpa [#allocation3], 0
    %8 = vsyncpa [#allocation6], 0
    %9 = vsyncpa [#allocation4], 0
    // Predicated region
    $region2: #{tpu_custom_call.1} parent=1 // pred_check
      _
    $region3: #{tpu_custom_call.1} parent=1 // pred_check_branch
      %11 = sbr.rel (0) target = $region5
    $region4: #{tpu_custom_call.1} parent=1 // pred_region
      %s13 = ssub.s32 256, 256
      %14 = vsyncadd [#allocation3], %s13
      %s15 = sshll.u32 [#allocation2], 4
      %s16 = int_to_ptr.vmem [resolvable:$true] %s15
      %21 = dma.hbm_to_vmem [thread:$0]  %s0, 256, %s16, [#allocation3], 128, 128, 8
    $region5: #{tpu_custom_call.1} parent=1 // pred_fallthru
      _
    // Predicated region
    $region6: #{tpu_custom_call.1} parent=1 // pred_check
      _
    $region7: #{tpu_custom_call.1} parent=1 // pred_check_branch
      %23 = sbr.rel (0) target = $region9
    $region8: #{tpu_custom_call.1} parent=1 // pred_region
      %s25 = ssub.s32 16, 16
      %26 = vsyncadd [#allocation6], %s25
      %s28 = sshll.u32 [#allocation5], 4
      %s29 = int_to_ptr.vmem [resolvable:$true] %s28
      %31 = dma.hbm_to_vmem [thread:$0]  %s1, 16, %s29, [#allocation6]
    $region9: #{tpu_custom_call.1} parent=1 // pred_fallthru
      _
    // Predicated region
    $region10: #{tpu_custom_call.1} parent=1 // pred_check
      _
    $region11: #{tpu_custom_call.1} parent=1 // pred_check_branch
      %33 = sbr.rel (0) target = $region13
    $region12: #{tpu_custom_call.1} parent=1 // pred_region
      %34 = dma.done [#allocation3], 256
    $region13: #{tpu_custom_call.1} parent=1 // pred_fallthru
      _
    // Predicated region
    $region14: #{tpu_custom_call.1} parent=1 // pred_check
      _
    $region15: #{tpu_custom_call.1} parent=1 // pred_check_branch
      %36 = sbr.rel (0) target = $region17
    $region16: #{tpu_custom_call.1} parent=1 // pred_region
      %37 = dma.done [#allocation6], 16
    $region17: #{tpu_custom_call.1} parent=1 // pred_fallthru
      _
    %v38 = vld [vmem:[#allocation2] sm:$0xff]
    %v39 = vld [vmem:[#allocation2 + $0x8] sm:$0xff]
    %v40 = vmul.f32 %v38, %v38
    %v41 = vmul.f32 %v39, %v39
    %42 = vadd.xlane.f32.xlu0 %v40
    %v43 = vpop.xlane.xlu0 %42
    %44 = vadd.xlane.f32.xlu0 %v41
    %v45 = vpop.xlane.xlu0 %44
    %v46 = vmul.f32 %v43, 0.0078125
    %v47 = vmul.f32 %v45, 0.0078125
    %v48 = vadd.f32 %v46, 1e-05
    %v49 = vadd.f32 %v47, 1e-05
    %v50 = vrsqrt.pop %v48
    %v51 = vrsqrt.pop %v49
    %v52 = vld [vmem:[#allocation5] sm:$0x1]
    %v54 = vlaneseq
    %v55 = vshrl.u32 %v54, 7
    %v56 = vsub.s32 0, %v55
    %v57 = vrot.slane %v52, %v56
    %v59 = vmul.f32 %v38, %v57
    %v60 = vmul.f32 %v39, %v57
    %v61 = vmul.f32 %v59, %v50
    %v62 = vmul.f32 %v60, %v51
    %63 = vst [vmem:[#allocation7] sm:$0xff] %v61
    %64 = vst [vmem:[#allocation7 + $0x8] sm:$0xff] %v62
    // Predicated region
    $region18: #{tpu_custom_call.1} parent=1 // pred_check
      _
    $region19: #{tpu_custom_call.1} parent=1 // pred_check_branch
      %66 = sbr.rel (0) target = $region21
    $region20: #{tpu_custom_call.1} parent=1 // pred_region
      %s68 = ssub.s32 256, 256
      %69 = vsyncadd [#allocation4], %s68
      %s70 = sshll.u32 [#allocation7], 4
      %s71 = int_to_ptr.vmem [resolvable:$true] %s70
      %76 = dma.vmem_to_hbm [thread:$0]  %s71, 256, %s2, [#allocation4], 128, 128, 8
    $region21: #{tpu_custom_call.1} parent=1 // pred_fallthru
      _
    // Predicated region
    $region22: #{tpu_custom_call.1} parent=1 // pred_check
      _
    $region23: #{tpu_custom_call.1} parent=1 // pred_check_branch
      %78 = sbr.rel (0) target = $region25
    $region24: #{tpu_custom_call.1} parent=1 // pred_region
      %79 = dma.done [#allocation4], 256
    $region25: #{tpu_custom_call.1} parent=1 // pred_fallthru
      _
    %80 = vsyncpa [#allocation3], 1
    %81 = vsyncpa [#allocation6], 1
    %82 = vsyncpa [#allocation4], 1

</llo_original>
